<compile_context>
chip_gen: v6e
topology: v6e:2x2x1
jax: 0.10.0
libtpu: 0.0.40
codegen_flags: <defaults>
</compile_context>

<pallas_src>
import functools
import math

import jax
import jax.numpy as jnp
from jax.experimental import pallas as pl
from jax.experimental.pallas import tpu as pltpu

_LANE = 128
_SUBLANE = 8


def make_sinusoidal_pe(embed_dim, max_len=1000, dtype=jnp.float32):
    """Build the (max_len, embed_dim) sinusoidal table exactly like the module."""
    position = jnp.arange(0.0, max_len, dtype=jnp.float32)[:, None]            # (L, 1)
    div_term = jnp.exp(
        jnp.arange(0.0, embed_dim, 2.0, dtype=jnp.float32)
        * -(math.log(10000.0) / embed_dim))                                     # (E/2,)
    angles = position * div_term                                                # (L, E/2)
    pe = jnp.zeros((max_len, embed_dim), dtype=jnp.float32)
    pe = pe.at[:, 0::2].set(jnp.sin(angles))
    pe = pe.at[:, 1::2].set(jnp.cos(angles))
    return pe.astype(dtype)


def _sublane_granule(itemsize):
    # Native packed sublane tile: (8,128) f32, (16,128) bf16, (32,128) int8/fp8.
    return {4: 8, 2: 16, 1: 32}.get(int(itemsize), _SUBLANE)


def _choose_fold_cols(total, granule):
    """Column width for the (B, r, cols) refold: a multiple of 128 dividing
    `total`, preferring r = total//cols >= granule and cols <= 2048 (full-width,
    contiguous DMA per row).  Returns None if no lane-dense factorization."""
    divisors = [c for c in range(_LANE, total + 1, _LANE) if total % c == 0]
    if not divisors:
        return None
    good = [c for c in divisors if total // c >= granule and c <= 2048]
    if good:
        return max(good)
    good = [c for c in divisors if total // c >= granule]
    if good:
        return min(good)
    return min(divisors)


def _choose_tiles(G, R, C, itemsize, apply_dropout, granule):
    """Pick (bg, tr, tc) for the (G, R, C) view.  Last two block dims are
    (multiple-of-granule, multiple-of-128) or full dims; ~2-4 MiB per x block."""
    max_tc = 8192
    tc = C if C <= max_tc else max_tc
    # Train mode materializes dropout temporaries at block size -> smaller
    # target keeps v7x (64 MiB VMEM) comfortable; eval uses the ~4 MiB knee.
    target_bytes = (2 if apply_dropout else 4) * 1024 * 1024
    target_elems = max(1, target_bytes // max(int(itemsize), 1))
    if R <= granule:
        tr = R
    else:
        rows_budget = max(1, target_elems // tc)
        tr = granule * max(1, min(rows_budget // granule, R // granule))
    bg = max(1, min(G, target_elems // max(1, tr * tc)))
    # Megacore: guarantee >= 2 grid steps when the shape allows, so
    # dimension_semantics="parallel" can shard across both v7x TensorCores.
    if pl.cdiv(R, tr) * pl.cdiv(C, tc) * pl.cdiv(G, bg) == 1:
        if tc >= 2 * _LANE and tc % (2 * _LANE) == 0:
            tc //= 2
        elif tr >= 2 * granule and tr % (2 * granule) == 0:
            tr //= 2
        elif bg > 1:
            bg = (bg + 1) // 2
    return bg, tr, tc


def _pe_add_dropout_kernel(x_ref, pe_ref, o_ref, *, apply_dropout, keep_thr31,
                           keep_scale, seed_mix, dim1, dim2, bg, tr, tc):
    # x_ref: (bg, tr, tc); pe_ref: (tr, tc) (folded) or (1, tc) (fallback).
    x = x_ref[...]
    pe = pe_ref[...]
    y = x + pe[None, :, :]          # broadcast over batch (and rows if pe has 1 row)

    if apply_dropout:
        # Stateless per-element dropout mask: lowbias32-style hash of the global
        # flat element index mixed with the seed.  Pure 32-bit VPU integer ops
        # (works on hardware and in interpret mode); integer threshold compare.
        j0 = pl.program_id(0) * tc   # column-tile (outermost grid axis)
        i0 = pl.program_id(1) * tr   # row-tile
        g0 = pl.program_id(2) * bg   # batch-tile (innermost grid axis)
        gi = jax.lax.broadcasted_iota(jnp.int32, (bg, tr, tc), 0) + g0
        ri = jax.lax.broadcasted_iota(jnp.int32, (bg, tr, tc), 1) + i0
        ci = jax.lax.broadcasted_iota(jnp.int32, (bg, tr, tc), 2) + j0
        # Flat index in the original (B, S, E) layout == independent of folding.
        flat = ((gi * dim1 + ri) * dim2 + ci).astype(jnp.uint32)
        h = flat ^ jnp.uint32(seed_mix)
        h = h ^ (h >> 16)
        h = h * jnp.uint32(0x7FEB352D)
        h = h ^ (h >> 15)
        h = h * jnp.uint32(0x846CA68B)
        h = h ^ (h >> 16)
        # Top 31 bits -> value in [0, 2^31): safe under signed or unsigned compare.
        keep = (h >> 1) >= jnp.uint32(keep_thr31)
        y = jnp.where(keep, y * jnp.asarray(keep_scale, y.dtype),
                      jnp.zeros_like(y))

    o_ref[...] = y.astype(o_ref.dtype)


def positional_encoding(x, pe, rate=1.0, dropout_rate=0.0, is_training=False,
                        seed=0):
    """x: [batch, seq, embed]; pe: [max_len, embed] (float32 table)."""
    B, S, E = x.shape
    assert S <= pe.shape[0], "sequence longer than positional-encoding table"
    assert E == pe.shape[1], "embed_dim mismatch with positional-encoding table"

    total = S * E
    itemsize = jnp.dtype(x.dtype).itemsize
    granule = _sublane_granule(itemsize)
    apply_dropout = bool(is_training) and float(dropout_rate) > 0.0

    # Pre-fold `rate` into the table once and ship pe in x.dtype (halves pe DMA
    # bytes for bf16; on v5e Mosaic upcasts the narrow add internally).
    pe_scaled = (pe[:S, :].astype(jnp.float32) * jnp.float32(rate)).astype(x.dtype)

    # Layout selection.
    cols = _choose_fold_cols(total, granule) if B < granule else None
    if cols is not None and total // cols > 1:
        # Sublane-dense refold: rows of each batch element go on the sublane axis.
        G, R, C = B, total // cols, cols
        pe2d = pe_scaled.reshape(R, C)
        pe_follows_rows = True
    else:
        # Fallback: batch on the sublane axis (dense when B >= granule).
        G, R, C = 1, B, total
        pe2d = pe_scaled.reshape(1, C)
        pe_follows_rows = False
    x3d = x.reshape(G, R, C)

    bg, tr, tc = _choose_tiles(G, R, C, itemsize, apply_dropout, granule)
    n_c, n_r, n_g = pl.cdiv(C, tc), pl.cdiv(R, tr), pl.cdiv(G, bg)

    p = float(dropout_rate)
    keep_thr31 = min((1 << 31) - 1, int(round(p * float(1 << 31))))
    keep_scale = 1.0 / (1.0 - p) if apply_dropout else 1.0
    seed_mix = (int(seed) * 0x9E3779B1 + 0x9E3779B9) & 0xFFFFFFFF

    kernel = functools.partial(
        _pe_add_dropout_kernel,
        apply_dropout=apply_dropout,
        keep_thr31=keep_thr31, keep_scale=keep_scale, seed_mix=seed_mix,
        dim1=R, dim2=C, bg=bg, tr=tr, tc=tc)

    # pe block: varies with the row tile when folded, column-only otherwise.
    if pe_follows_rows:
        pe_spec = pl.BlockSpec((tr, tc), lambda j, i, g: (i, j))
    else:
        pe_spec = pl.BlockSpec((1, tc), lambda j, i, g: (0, j))

    out3d = pl.pallas_call(
        kernel,
        out_shape=jax.ShapeDtypeStruct((G, R, C), x.dtype),
        grid_spec=pltpu.PrefetchScalarGridSpec(
            num_scalar_prefetch=0,
            # Column tiles outermost, batch tiles innermost: pe's block index is
            # constant across the inner axes, so Pallas keeps it resident
            # instead of re-DMAing it once per batch/row tile.
            grid=(n_c, n_r, n_g),
            in_specs=[
                pl.BlockSpec((bg, tr, tc), lambda j, i, g: (g, i, j)),  # x
                pe_spec,                                                 # pe
            ],
            out_specs=pl.BlockSpec((bg, tr, tc), lambda j, i, g: (g, i, j)),
        ),
        compiler_params=pltpu.CompilerParams(
            dimension_semantics=("parallel", "parallel", "parallel"),
            vmem_limit_bytes=32 * 1024 * 1024),
        cost_estimate=pl.CostEstimate(
            flops=B * total,
            transcendentals=0,
            bytes_accessed=2 * B * total * itemsize + pe2d.size * itemsize),
    )(x3d, pe2d)

    return out3d.reshape(B, S, E)


def positional_encoding_reference(x, pe, rate=1.0):
    # Pure-JAX reference mirroring the PyTorch forward (eval mode: dropout = id).
    S = x.shape[1]
    return x + (pe[None, :S, :].astype(jnp.float32)
                * jnp.float32(rate)).astype(x.dtype)


if __name__ == "__main__":
    key = jax.random.PRNGKey(0)
    rate, dropout_p = 1.0, 0.1
    embed_dim, max_len = 32, 64
    pe_table = make_sinusoidal_pe(embed_dim, max_len)

    # 1) Small batch, folded layout with r < 8 (batch=2, seq=8, embed=32).
    x1 = jax.random.normal(jax.random.fold_in(key, 1), (2, 8, embed_dim), jnp.float32)
    o1 = jax.block_until_ready(positional_encoding(x1, pe_table, rate=rate))
    r1 = positional_encoding_reference(x1, pe_table, rate)
    assert o1.shape == x1.shape
    assert jnp.allclose(o1, r1, atol=1e-5, rtol=1e-5), "mismatch (fold r<8)"

    # 2) Small batch, folded layout with r >= 8 (batch=2, seq=32, embed=32).
    x2 = jax.random.normal(jax.random.fold_in(key, 2), (2, 32, embed_dim), jnp.float32)
    o2 = jax.block_until_ready(positional_encoding(x2, pe_table, rate=rate))
    r2 = positional_encoding_reference(x2, pe_table, rate)
    assert jnp.allclose(o2, r2, atol=1e-5, rtol=1e-5), "mismatch (fold r>=8)"

    # 3) Batch >= 8: sublane-broadcast fallback layout (batch=8, seq=8, embed=32).
    x3 = jax.random.normal(jax.random.fold_in(key, 3), (8, 8, embed_dim), jnp.float32)
    o3 = jax.block_until_ready(positional_encoding(x3, pe_table, rate=rate))
    r3 = positional_encoding_reference(x3, pe_table, rate)
    assert jnp.allclose(o3, r3, atol=1e-5, rtol=1e-5), "mismatch (batch>=8)"

    # 4) Train-mode dropout: every element must be 0 (dropped) or ref/(1-p) (kept),
    #    with a keep fraction near 1-p.
    od = jax.block_until_ready(positional_encoding(
        x2, pe_table, rate=rate, dropout_rate=dropout_p, is_training=True,
        seed=1234))
    kept = r2 / (1.0 - dropout_p)
    consistent = (jnp.abs(od) <= 1e-6) | (
        jnp.abs(od - kept) <= 1e-4 * (1.0 + jnp.abs(kept)))
    assert od.shape == x2.shape
    assert bool(jnp.all(consistent)), "dropout output inconsistent with mask semantics"
    keep_frac = float(jnp.mean((jnp.abs(od) > 1e-6).astype(jnp.float32)))
    assert 0.75 < keep_frac < 0.995, f"dropout keep fraction off: {keep_frac}"

    print("KERNEL_OK")
</pallas_src>

<mosaic_0001>
module attributes {stable_mosaic.version = 11 : i64} {
  func.func @_pe_add_dropout_kernel(%arg0: i32, %arg1: i32, %arg2: i32, %arg3: memref<1x2x128xf32, #tpu.memory_space<vmem>>, %arg4: memref<2x128xf32, #tpu.memory_space<vmem>>, %arg5: memref<1x2x128xf32, #tpu.memory_space<vmem>>) attributes {dimension_semantics = [#tpu.dimension_semantics<parallel>, #tpu.dimension_semantics<parallel>, #tpu.dimension_semantics<parallel>], iteration_bounds = array<i64: 1, 1, 2>, scalar_prefetch = 0 : i64, scratch_operands = 0 : i64, tpu.core_type = #tpu.core_type<tc>, window_params = [{transform_indices = @transform_0, window_bounds = array<i64: 1, 2, 128>}, {transform_indices = @transform_1, window_bounds = array<i64: 2, 128>}, {transform_indices = @transform_2, window_bounds = array<i64: 1, 2, 128>}]} {
    %c0 = arith.constant 0 : index
    %c0_0 = arith.constant 0 : index
    %c0_1 = arith.constant 0 : index
    %0 = vector.load %arg3[%c0, %c0_0, %c0_1] : memref<1x2x128xf32, #tpu.memory_space<vmem>>, vector<1x2x128xf32>
    %c0_2 = arith.constant 0 : index
    %c0_3 = arith.constant 0 : index
    %1 = vector.load %arg4[%c0_2, %c0_3] : memref<2x128xf32, #tpu.memory_space<vmem>>, vector<2x128xf32>
    %2 = vector.shape_cast %1 : vector<2x128xf32> to vector<1x2x128xf32>
    %3 = arith.addf %0, %2 : vector<1x2x128xf32>
    %c0_4 = arith.constant 0 : index
    %c0_5 = arith.constant 0 : index
    %c0_6 = arith.constant 0 : index
    %4 = vector.load %arg5[%c0_4, %c0_5, %c0_6] : memref<1x2x128xf32, #tpu.memory_space<vmem>>, vector<1x2x128xf32>
    tpu.vector_store %arg5[%c0_4, %c0_5, %c0_6], %3 {strides = array<i32>} : memref<1x2x128xf32, #tpu.memory_space<vmem>>, vector<1x2x128xf32>,
    return
  }
  func.func @transform_0(%arg0: i32, %arg1: i32, %arg2: i32) -> (i32, i32, i32) {
    %c0_i32 = arith.constant 0 : i32
    return %arg2, %arg1, %arg0 : i32, i32, i32
  }
  func.func @transform_1(%arg0: i32, %arg1: i32, %arg2: i32) -> (i32, i32) {
    %c0_i32 = arith.constant 0 : i32
    return %arg1, %arg0 : i32, i32
  }
  func.func @transform_2(%arg0: i32, %arg1: i32, %arg2: i32) -> (i32, i32, i32) {
    %c0_i32 = arith.constant 0 : i32
    return %arg2, %arg1, %arg0 : i32, i32, i32
  }
}

</mosaic_0001>

<llo_original>
// kernel: tpu_custom_call.1
$region0: #{tpu_custom_call.1}
  #allocation0 [shape = 'u32[]', space=smem, size = 0x4, offset = 0x4, fixed_abs, tag = 'smem constant byte address 0x4 - core index']
  #allocation1 [shape = 'u32[144,128]{1,0:T(1,128)}', space=vmem, size = 0x12000, scoped, tag = 'internal scratch']
  %s0 = inlined_call_operand.hbm [shape: f32[2,2,128], index: 0, kind: input, shape index: {}]
  %s1 = inlined_call_operand.hbm [shape: f32[2,128], index: 1, kind: input, shape index: {}]
  %s2 = inlined_call_operand.hbm [shape: f32[2,2,128], index: 2, kind: output, shape index: {}]
  %s3 = sld [smem:[#allocation0]]
  $region49: #{tpu_custom_call.1} parent=0
    _
  %s5 = ssub.s32 1, %s3
  %s6 = scalar_select 0, %s5, %s3
  $region1: #{tpu_custom_call.1} parent=0
    #allocation2 [shape = 'u8[2048]{0}', space=vmem, size = 0x800, scoped, tag = 'input window, operand 0']
    #allocation3 [shape = 's32[2]{0}', space=sflag, size = 0x8, scoped, tag = 'scoped memory for tpu_custom_call.1']
    #allocation4 [shape = 's32[2]{0}', space=sflag, size = 0x8, scoped, tag = 'scoped memory for tpu_custom_call.1']
    #allocation5 [shape = 'u8[1024]{0}', space=vmem, size = 0x400, scoped, tag = 'input window, operand 1, single buffered']
    #allocation6 [shape = 's32[1]{0}', space=sflag, size = 0x4, scoped, tag = 'scoped memory for tpu_custom_call.1']
    #allocation7 [shape = 'u8[2048]{0}', space=vmem, size = 0x800, scoped, tag = 'output window, operand 0']
    %7 = vsyncpa [#allocation3], 0
    %s8 = scalar_lea.sflag [#allocation3], 1
    %9 = vsyncpa %s8, 0
    %10 = vsyncpa [#allocation6], 0
    %11 = vsyncpa [#allocation4], 0
    %s12 = scalar_lea.sflag [#allocation4], 1
    %13 = vsyncpa %s12, 0
    loop: start=0, step=1, limit=4
    $region2: #{tpu_custom_call.1} parent=1 // loop_pre_header
      _
    $region3: #{tpu_custom_call.1} parent=1 // loop_header
      %s15 = sphi 0, %s19
      %p16 = scmp.ge.s32.totalorder %s15, 4
      %s22 = sphi 0, %s41
      %s23 = sphi 0, %s37
      %s24 = sphi 0, %s33
      %s25 = sphi 0, %s22
      %s26 = sphi 0, %s23
      %s27 = sphi 0, %s24
      %s28 = sphi 0, %s25
      %s29 = sphi 0, %s26
      %s30 = sphi 0, %s27
      %s48 = sphi 0, %s50
      %s51 = sphi 0, %s48
      %s52 = sphi 0, %s51
      %s68 = sphi 0, %s52
      %s76 = sphi 0, %s78
      %s79 = sphi 0, %s76
      %s80 = sphi 0, %s79
      %s96 = sphi 0, %s80
      %s106 = sphi 0, %s108
      %s109 = sphi 0, %s106
      %s110 = sphi 0, %s109
      %s126 = sphi 0, %s110
    $region4: #{tpu_custom_call.1} parent=1 // loop_header_branch
      %18 = sbr.rel (%p16) target = $region8
    $region5: #{tpu_custom_call.1} parent=1 // loop_body
      %s20 = ssub.s32 %s15, 1
      %s21 = ssub.s32 %s15, 2
      %s31 = sadd.s32 1, %s24
      %p32 = scmp.ge.s32.totalorder %s31, 2
      %s33 = scalar_select %p32, 0, %s31
      %s34 = sadd.s32 1, %s23
      %s35 = scalar_select %p32, %s34, %s23
      %p36 = scmp.ge.s32.totalorder %s35, 1
      %s37 = scalar_select %p36, 0, %s35
      %s38 = sadd.s32 1, %s22
      %s39 = scalar_select %p36, %s38, %s22
      %p40 = scmp.ge.s32.totalorder %s39, 1
      %s41 = scalar_select %p40, 0, %s39
      %s42 = ssub.s32 %s24, %s33
      %s43 = ssub.s32 %s23, %s37
      %s44 = sor.u32 %s42, %s43
      %s45 = ssub.s32 %s22, %s41
      %s46 = sor.u32 %s44, %s45
      %p47 = scmp.eq.s32.totalorder %s46, 0
      %s49 = sadd.s32 %s48, 1
      %s50 = scalar_select %p47, %s48, %s49
      %p53 = pneg %p47
      %p54 = scmp.eq.s32.totalorder %s15, 1
      %p55 = por %p53, %p54
      %p56 = scmp.ne.s32.totalorder %s48, %s51
      %p57 = scmp.eq.s32.totalorder %s15, 0
      %p58 = por %p56, %p57
      %p59 = scmp.ne.s32.totalorder %s48, %s51
      %p60 = scmp.eq.s32.totalorder %s20, 1
      %p61 = por %p59, %p60
      %p62 = scmp.ne.s32.totalorder %s51, %s52
      %p63 = scmp.eq.s32.totalorder %s20, 0
      %p64 = por %p62, %p63
      %p65 = scmp.ne.s32.totalorder %s51, %s52
      %p66 = scmp.eq.s32.totalorder %s21, 1
      %p67 = por %p65, %p66
      %p69 = scmp.ne.s32.totalorder %s52, %s68
      %p70 = scmp.eq.s32.totalorder %s21, 0
      %p71 = por %p69, %p70
      %s72 = ssub.s32 %s23, %s37
      %s73 = ssub.s32 %s22, %s41
      %s74 = sor.u32 %s72, %s73
      %p75 = scmp.eq.s32.totalorder %s74, 0
      %s77 = sadd.s32 %s76, 1
      %s78 = scalar_select %p75, %s76, %s77
      %p81 = pneg %p75
      %p82 = scmp.eq.s32.totalorder %s15, 1
      %p83 = por %p81, %p82
      %p84 = scmp.ne.s32.totalorder %s76, %s79
      %p85 = scmp.eq.s32.totalorder %s15, 0
      %p86 = por %p84, %p85
      %p87 = scmp.ne.s32.totalorder %s76, %s79
      %p88 = scmp.eq.s32.totalorder %s20, 1
      %p89 = por %p87, %p88
      %p90 = scmp.ne.s32.totalorder %s79, %s80
      %p91 = scmp.eq.s32.totalorder %s20, 0
      %p92 = por %p90, %p91
      %p93 = scmp.ne.s32.totalorder %s79, %s80
      %p94 = scmp.eq.s32.totalorder %s21, 1
      %p95 = por %p93, %p94
      %p97 = scmp.ne.s32.totalorder %s80, %s96
      %p98 = scmp.eq.s32.totalorder %s21, 0
      %p99 = por %p97, %p98
      %s100 = ssub.s32 %s24, %s33
      %s101 = ssub.s32 %s23, %s37
      %s102 = sor.u32 %s100, %s101
      %s103 = ssub.s32 %s22, %s41
      %s104 = sor.u32 %s102, %s103
      %p105 = scmp.eq.s32.totalorder %s104, 0
      %s107 = sadd.s32 %s106, 1
      %s108 = scalar_select %p105, %s106, %s107
      %p111 = pneg %p105
      %p112 = scmp.eq.s32.totalorder %s15, 1
      %p113 = por %p111, %p112
      %p114 = scmp.ne.s32.totalorder %s106, %s109
      %p115 = scmp.eq.s32.totalorder %s15, 0
      %p116 = por %p114, %p115
      %p117 = scmp.ne.s32.totalorder %s106, %s109
      %p118 = scmp.eq.s32.totalorder %s20, 1
      %p119 = por %p117, %p118
      %p120 = scmp.ne.s32.totalorder %s109, %s110
      %p121 = scmp.eq.s32.totalorder %s20, 0
      %p122 = por %p120, %p121
      %p123 = scmp.ne.s32.totalorder %s109, %s110
      %p124 = scmp.eq.s32.totalorder %s21, 1
      %p125 = por %p123, %p124
      %p127 = scmp.ne.s32.totalorder %s110, %s126
      %p128 = scmp.eq.s32.totalorder %s21, 0
      %p129 = por %p127, %p128
      %p130 = scmp.le.s32.totalorder 1, %s15
      %p131 = scmp.lt.s32.totalorder %s15, 3
      %p132 = pnand %p130, %p131
      %p133 = pneg %p132
      // Predicated region
      $region9: #{tpu_custom_call.1} parent=5 // pred_check
        _
      $region10: #{tpu_custom_call.1} parent=5 // pred_check_branch
        %135 = sbr.rel (%p132) target = $region12
      $region11: #{tpu_custom_call.1} parent=5 // pred_region
        %s136 = ssub.s32 %s15, 1
        // Predicated region
        $region13: #{tpu_custom_call.1} parent=11 // pred_check
          %p137 = pneg %p92
        $region14: #{tpu_custom_call.1} parent=11 // pred_check_branch
          %139 = sbr.rel (%p137) target = $region16
        $region15: #{tpu_custom_call.1} parent=11 // pred_region
          %s141 = ssub.s32 32, 32
          %142 = vsyncadd [#allocation6], %s141
          %s143 = sadd.s32 %s25, %s26
          %s144 = smul.addr %s143, 32
          %s145 = scalar_lea.hbm %s1, %s144
          %s147 = sshll.u32 [#allocation5], 4
          %s148 = int_to_ptr.vmem [resolvable:$true] %s147
          %150 = dma.hbm_to_vmem [thread:$0]  %s145, 32, %s148, [#allocation6]
        $region16: #{tpu_custom_call.1} parent=11 // pred_fallthru
          _
      $region12: #{tpu_custom_call.1} parent=5 // pred_fallthru
        _
      %p151 = scmp.lt.s32.totalorder %s15, 2
      // Predicated region
      $region17: #{tpu_custom_call.1} parent=5 // pred_check
        %p152 = pneg %p151
      $region18: #{tpu_custom_call.1} parent=5 // pred_check_branch
        %154 = sbr.rel (%p152) target = $region20
      $region19: #{tpu_custom_call.1} parent=5 // pred_region
        // Predicated region
        $region21: #{tpu_custom_call.1} parent=19 // pred_check
          %p155 = pneg %p58
        $region22: #{tpu_custom_call.1} parent=19 // pred_check_branch
          %157 = sbr.rel (%p155) target = $region24
        $region23: #{tpu_custom_call.1} parent=19 // pred_region
          %s158 = sand.u32 %s48, 1
          %s159 = scalar_lea.sflag [#allocation3], %s158
          %s160 = sand.u32 %s48, 1
          %s161 = smul.addr %s160, 2
          %s162 = scalar_lea.vmem [#allocation2], %s161
          %s164 = ssub.s32 32, 32
          %165 = vsyncadd %s159, %s164
          %s166 = sadd.s32 %s22, %s23
          %s167 = sadd.s32 %s166, %s24
          %s168 = smul.addr %s167, 32
          %s169 = scalar_lea.hbm %s0, %s168
          %s171 = sshll.u32 %s162, 4
          %s172 = int_to_ptr.vmem [resolvable:$true] %s171
          %174 = dma.hbm_to_vmem [thread:$0]  %s169, 32, %s172, %s159
        $region24: #{tpu_custom_call.1} parent=19 // pred_fallthru
          _
      $region20: #{tpu_custom_call.1} parent=5 // pred_fallthru
        _
      %p175 = scmp.le.s32.totalorder 1, %s15
      %p176 = scmp.lt.s32.totalorder %s15, 3
      %p177 = pnand %p175, %p176
      %p178 = pneg %p177
      // Predicated region
      $region25: #{tpu_custom_call.1} parent=5 // pred_check
        _
      $region26: #{tpu_custom_call.1} parent=5 // pred_check_branch
        %180 = sbr.rel (%p177) target = $region28
      $region27: #{tpu_custom_call.1} parent=5 // pred_region
        %s181 = ssub.s32 %s15, 1
        %s182 = sand.u32 %s51, 1
        %s183 = scalar_lea.sflag [#allocation3], %s182
        %s184 = sand.u32 %s51, 1
        %s185 = smul.addr %s184, 2
        %s186 = scalar_lea.vmem [#allocation2], %s185
        // Predicated region
        $region29: #{tpu_custom_call.1} parent=27 // pred_check
          %p187 = pneg %p64
        $region30: #{tpu_custom_call.1} parent=27 // pred_check_branch
          %189 = sbr.rel (%p187) target = $region32
        $region31: #{tpu_custom_call.1} parent=27 // pred_region
          %190 = dma.done %s183, 32
        $region32: #{tpu_custom_call.1} parent=27 // pred_fallthru
          _
        // Predicated region
        $region33: #{tpu_custom_call.1} parent=27 // pred_check
          %p191 = pneg %p92
        $region34: #{tpu_custom_call.1} parent=27 // pred_check_branch
          %193 = sbr.rel (%p191) target = $region36
        $region35: #{tpu_custom_call.1} parent=27 // pred_region
          %194 = dma.done [#allocation6], 32
        $region36: #{tpu_custom_call.1} parent=27 // pred_fallthru
          _
        %s195 = sand.u32 %s51, 1
        %s196 = scalar_lea.sflag [#allocation3], %s195
        %s197 = sand.u32 %s51, 1
        %s198 = smul.addr %s197, 2
        %s199 = scalar_lea.vmem [#allocation2], %s198
        %p200 = pneg %p64
        %p201 = pneg %p61
        %p202 = pneg %p92
        %p203 = pneg %p89
        %p204 = pneg %p122
        %p205 = pneg %p119
        %s206 = sand.u32 %s109, 1
        %s207 = scalar_lea.sflag [#allocation4], %s206
        %s208 = sand.u32 %s109, 1
        %s209 = smul.addr %s208, 2
        %s210 = scalar_lea.vmem [#allocation7], %s209
        %v211 = vld [vmem:[%s186] sm:$0x3]
        %v212 = vld [vmem:[#allocation5] sm:$0x3]
        %v213 = vadd.f32 %v211, %v212
        %214 = vst [vmem:[%s210] sm:$0x3] %v213
        %s215 = sand.u32 %s109, 1
        %s216 = scalar_lea.sflag [#allocation4], %s215
        %s217 = sand.u32 %s109, 1
        %s218 = smul.addr %s217, 2
        %s219 = scalar_lea.vmem [#allocation7], %s218
        // Predicated region
        $region37: #{tpu_custom_call.1} parent=27 // pred_check
          %p220 = pneg %p119
        $region38: #{tpu_custom_call.1} parent=27 // pred_check_branch
          %222 = sbr.rel (%p220) target = $region40
        $region39: #{tpu_custom_call.1} parent=27 // pred_region
          %s224 = ssub.s32 32, 32
          %225 = vsyncadd %s216, %s224
          %s226 = sadd.s32 %s25, %s26
          %s227 = sadd.s32 %s226, %s27
          %s228 = smul.addr %s227, 32
          %s229 = scalar_lea.hbm %s2, %s228
          %s231 = sshll.u32 %s219, 4
          %s232 = int_to_ptr.vmem [resolvable:$true] %s231
          %234 = dma.vmem_to_hbm [thread:$0]  %s232, 32, %s229, %s216
        $region40: #{tpu_custom_call.1} parent=27 // pred_fallthru
          _
      $region28: #{tpu_custom_call.1} parent=5 // pred_fallthru
        _
      %p235 = scmp.le.s32.totalorder 2, %s15
      // Predicated region
      $region41: #{tpu_custom_call.1} parent=5 // pred_check
        %p236 = pneg %p235
      $region42: #{tpu_custom_call.1} parent=5 // pred_check_branch
        %238 = sbr.rel (%p236) target = $region44
      $region43: #{tpu_custom_call.1} parent=5 // pred_region
        %s239 = ssub.s32 %s15, 2
        // Predicated region
        $region45: #{tpu_custom_call.1} parent=43 // pred_check
          %p240 = pneg %p125
        $region46: #{tpu_custom_call.1} parent=43 // pred_check_branch
          %242 = sbr.rel (%p240) target = $region48
        $region47: #{tpu_custom_call.1} parent=43 // pred_region
          %s243 = sand.u32 %s110, 1
          %s244 = scalar_lea.sflag [#allocation4], %s243
          %s245 = sand.u32 %s110, 1
          %s246 = smul.addr %s245, 2
          %s247 = scalar_lea.vmem [#allocation7], %s246
          %248 = dma.done %s244, 32
        $region48: #{tpu_custom_call.1} parent=43 // pred_fallthru
          _
      $region44: #{tpu_custom_call.1} parent=5 // pred_fallthru
        _
    $region6: #{tpu_custom_call.1} parent=1 // loop_footer
      %s19 = sadd.s32 1, %s15
    $region7: #{tpu_custom_call.1} parent=1 // loop_footer_branch
      %14 = sbr.rel target = $region3
    $region8: #{tpu_custom_call.1} parent=1 // loop_exit
      _
    %249 = vsyncpa [#allocation3], 1
    %s250 = scalar_lea.sflag [#allocation3], 1
    %251 = vsyncpa %s250, 1
    %252 = vsyncpa [#allocation6], 1
    %253 = vsyncpa [#allocation4], 1
    %s254 = scalar_lea.sflag [#allocation4], 1
    %255 = vsyncpa %s254, 1

</llo_original>
